<compile_context>
chip_gen: v7x
topology: tpu7x:2x2x1
jax: 0.10.0
libtpu: 0.0.40
codegen_flags: <defaults>
</compile_context>

<pallas_src>
import functools

import jax
import jax.numpy as jnp
from jax.experimental import pallas as pl
from jax.experimental.pallas import tpu as pltpu


def _round_up(x, m):
    return (x + m - 1) // m * m


def _pad2(a, rows, cols, dtype=None):
    r, c = a.shape
    a = jnp.pad(a, ((0, rows - r), (0, cols - c)))
    return a if dtype is None else a.astype(dtype)


# --------------------------------------------------------------------------
# Kernel
# --------------------------------------------------------------------------
def _actor_kernel(obs_ref,
                  w1_ref, b1_ref, g_ref, beta_ref,
                  w2_ref, b2_ref,
                  w3_ref, b3_ref,
                  w4_ref, b4_ref,
                  mu_ref,
                  *, feature_dim, act_dtype):
    cdt = w1_ref.dtype          # MXU operand dtype (bf16 fast path / f32 verify path)
    inv_f = 1.0 / feature_dim

    # ---- trunk: Linear -> LayerNorm -> Tanh --------------------------------
    # obs arrives in f32 (no wrapper-side bf16 copy); in-kernel cast rides VPU slack.
    h = jnp.dot(obs_ref[...].astype(cdt), w1_ref[...],
                preferred_element_type=jnp.float32)
    h = h + b1_ref[...]

    # Two-pass LayerNorm stats in f32.  Padded feature columns of h are exactly
    # zero, so summing over the padded width and dividing by the TRUE
    # feature_dim gives the exact mean; the centered values in padded columns
    # are masked out of the variance sum.
    mean = jnp.sum(h, axis=-1, keepdims=True) * inv_f
    if feature_dim == h.shape[-1]:
        centered = h - mean
    else:
        col = jax.lax.broadcasted_iota(jnp.int32, h.shape, dimension=1)
        centered = jnp.where(col < feature_dim, h - mean, 0.0)
    var = jnp.sum(centered * centered, axis=-1, keepdims=True) * inv_f
    h = (h - mean) * jax.lax.rsqrt(var + 1e-5)
    # gamma/beta are zero-padded, so padded columns return to exactly zero here.
    h = jnp.tanh((h * g_ref[...] + beta_ref[...]).astype(act_dtype)).astype(cdt)

    # ---- policy: Linear -> ReLU -> Linear -> ReLU -> Linear -> Tanh --------
    x = jnp.dot(h, w2_ref[...], preferred_element_type=jnp.float32) + b2_ref[...]
    x = jnp.maximum(x, 0.0).astype(cdt)
    x = jnp.dot(x, w3_ref[...], preferred_element_type=jnp.float32) + b3_ref[...]
    x = jnp.maximum(x, 0.0).astype(cdt)
    mu = jnp.dot(x, w4_ref[...], preferred_element_type=jnp.float32) + b4_ref[...]
    mu_ref[...] = jnp.tanh(mu)


# --------------------------------------------------------------------------
# Host-side parameter preparation (run ONCE at init / param-update time)
# --------------------------------------------------------------------------
def prepare_params(params, matmul_dtype=jnp.bfloat16):
    """Zero-pad all lane dims to multiples of 128 and cast matmul operands.

    Returns (padded_params_tuple, dims_dict).  Call once and reuse for every
    actor_forward step — the per-call path then only pads obs.
    """
    (w1, b1, ln_g, ln_b, w2, b2, w3, b3, w4, b4) = params
    R, F = w1.shape
    H = w2.shape[1]
    A = w4.shape[1]
    Rp, Fp, Hp, Ap = (_round_up(d, 128) for d in (R, F, H, A))

    padded = (
        _pad2(w1, Rp, Fp, matmul_dtype),
        _pad2(b1, 1, Fp),
        _pad2(ln_g, 1, Fp),
        _pad2(ln_b, 1, Fp),
        _pad2(w2, Fp, Hp, matmul_dtype),
        _pad2(b2, 1, Hp),
        _pad2(w3, Hp, Hp, matmul_dtype),
        _pad2(b3, 1, Hp),
        _pad2(w4, Hp, Ap, matmul_dtype),
        _pad2(b4, 1, Ap),
    )
    dims = dict(repr_dim=R, feature_dim=F, hidden_dim=H, action_dim=A,
                Rp=Rp, Fp=Fp, Hp=Hp, Ap=Ap, matmul_dtype=matmul_dtype)
    return padded, dims


# --------------------------------------------------------------------------
# Forward wrapper (per-step path)
# --------------------------------------------------------------------------
def actor_forward(obs, std_scalar, padded_params, dims, *,
                  block_b=256, activation_dtype=jnp.float32):
    """Returns (mu, std) — the parameters of the TruncatedNormal."""
    (w1_p, b1_p, g_p, beta_p, w2_p, b2_p, w3_p, b3_p, w4_p, b4_p) = padded_params
    B, R = obs.shape
    F, A = dims["feature_dim"], dims["action_dim"]
    Rp, Fp, Hp, Ap = dims["Rp"], dims["Fp"], dims["Hp"], dims["Ap"]
    mm_dtype = dims["matmul_dtype"]
    assert R == dims["repr_dim"]

    # Batch tiling: bf16 packs 16 rows per sublane group, f32 packs 8.
    row_mult = 16 if jnp.dtype(mm_dtype) == jnp.dtype(jnp.bfloat16) else 8
    block_b = _round_up(block_b, row_mult)
    Bp = _round_up(B, row_mult)
    if Bp <= block_b:
        bb = Bp
    else:
        bb = block_b
        Bp = _round_up(B, bb)
    num_blocks = Bp // bb
    # v7x megacore: with a single grid block the second TensorCore idles; split
    # moderately sized batches into two parallel blocks (harmless on v5e/v6e).
    if num_blocks == 1 and bb >= 256 and (bb // 2) % row_mult == 0:
        bb //= 2
        num_blocks = 2

    # Only obs is padded per call; it stays f32 (in-kernel cast to mm_dtype).
    obs_p = _pad2(obs, Bp, Rp)

    # VMEM budget from actual tile / resident-weight sizes (+50% headroom,
    # cap 56 MiB which is safe on v7x's 64 MiB physical VMEM).
    wbytes = ((Rp * Fp + Fp * Hp + Hp * Hp + Hp * Ap) * jnp.dtype(mm_dtype).itemsize
              + (3 * Fp + 2 * Hp + Ap) * 4)
    tbytes = bb * (Rp + Ap) * 4
    ibytes = bb * (Fp + 2 * Hp + Ap) * 4
    est = 2 * (wbytes + tbytes) + ibytes
    vmem_limit = int(min(max(int(est * 1.5), 32 * 1024 * 1024), 56 * 1024 * 1024))

    kernel = functools.partial(_actor_kernel,
                               feature_dim=F, act_dtype=activation_dtype)

    mu_p = pl.pallas_call(
        kernel,
        out_shape=jax.ShapeDtypeStruct((Bp, Ap), jnp.float32),
        grid=(num_blocks,),
        in_specs=[
            pl.BlockSpec((bb, Rp), lambda i: (i, 0)),   # obs (tiled over batch)
            pl.BlockSpec((Rp, Fp), lambda i: (0, 0)),   # W1 (resident)
            pl.BlockSpec((1, Fp), lambda i: (0, 0)),    # b1
            pl.BlockSpec((1, Fp), lambda i: (0, 0)),    # LN gamma
            pl.BlockSpec((1, Fp), lambda i: (0, 0)),    # LN beta
            pl.BlockSpec((Fp, Hp), lambda i: (0, 0)),   # W2
            pl.BlockSpec((1, Hp), lambda i: (0, 0)),    # b2
            pl.BlockSpec((Hp, Hp), lambda i: (0, 0)),   # W3
            pl.BlockSpec((1, Hp), lambda i: (0, 0)),    # b3
            pl.BlockSpec((Hp, Ap), lambda i: (0, 0)),   # W4
            pl.BlockSpec((1, Ap), lambda i: (0, 0)),    # b4
        ],
        out_specs=pl.BlockSpec((bb, Ap), lambda i: (i, 0)),
        compiler_params=pltpu.CompilerParams(
            dimension_semantics=("parallel",),
            vmem_limit_bytes=vmem_limit,
        ),
    )(obs_p, w1_p, b1_p, g_p, beta_p, w2_p, b2_p, w3_p, b3_p, w4_p, b4_p)

    mu = mu_p[:B, :A]
    # std is a broadcast constant — no need to write it from the kernel.
    std = jnp.full((B, A), std_scalar, dtype=mu.dtype)
    return mu, std


# --------------------------------------------------------------------------
# Reference + synthetic init
# --------------------------------------------------------------------------
def init_params(key, repr_dim, feature_dim, hidden_dim, action_dim):
    """Deterministic synthetic init (stand-in for utils.weight_init)."""
    ks = jax.random.split(key, 8)

    def lin(kw, kb, fan_in, fan_out):
        w = jax.random.normal(kw, (fan_in, fan_out), jnp.float32) / jnp.sqrt(fan_in)
        b = 0.01 * jax.random.normal(kb, (1, fan_out), jnp.float32)
        return w, b

    w1, b1 = lin(ks[0], ks[1], repr_dim, feature_dim)
    ln_g = jnp.ones((1, feature_dim), jnp.float32)
    ln_b = jnp.zeros((1, feature_dim), jnp.float32)
    w2, b2 = lin(ks[2], ks[3], feature_dim, hidden_dim)
    w3, b3 = lin(ks[4], ks[5], hidden_dim, hidden_dim)
    w4, b4 = lin(ks[6], ks[7], hidden_dim, action_dim)
    return (w1, b1, ln_g, ln_b, w2, b2, w3, b3, w4, b4)


def actor_reference(obs, std_scalar, params):
    """Pure-JAX f32 reference mirroring the PyTorch module."""
    (w1, b1, ln_g, ln_b, w2, b2, w3, b3, w4, b4) = params
    h = obs @ w1 + b1
    mean = h.mean(-1, keepdims=True)
    var = ((h - mean) ** 2).mean(-1, keepdims=True)
    h = (h - mean) / jnp.sqrt(var + 1e-5) * ln_g + ln_b
    h = jnp.tanh(h)
    x = jnp.maximum(h @ w2 + b2, 0.0)
    x = jnp.maximum(x @ w3 + b3, 0.0)
    mu = jnp.tanh(x @ w4 + b4)
    std = jnp.ones_like(mu) * std_scalar
    return mu, std


if __name__ == "__main__":
    # small shapes consistent with Actor(repr_dim, action_shape, feature_dim, hidden_dim)
    B, REPR_DIM, FEATURE_DIM, HIDDEN_DIM, ACTION_DIM = 8, 64, 32, 32, 6
    STD = 0.2

    key = jax.random.PRNGKey(0)
    k_obs, k_params = jax.random.split(key)
    obs = jax.random.normal(k_obs, (B, REPR_DIM), jnp.float32)
    params = init_params(k_params, REPR_DIM, FEATURE_DIM, HIDDEN_DIM, ACTION_DIM)

    mu_ref, std_ref = actor_reference(obs, STD, params)

    # f32 matmul path — tight semantic check.
    pp32, dims32 = prepare_params(params, matmul_dtype=jnp.float32)
    mu32, std32 = actor_forward(obs, STD, pp32, dims32)
    jax.block_until_ready((mu32, std32))
    assert mu32.shape == (B, ACTION_DIM) and std32.shape == (B, ACTION_DIM)
    assert jnp.allclose(mu32, mu_ref, atol=1e-5, rtol=1e-5)
    assert jnp.allclose(std32, std_ref, atol=1e-6)

    # bf16 matmul path (default perf path) — bf16-level tolerance vs f32 reference.
    pp16, dims16 = prepare_params(params, matmul_dtype=jnp.bfloat16)
    mu16, std16 = actor_forward(obs, STD, pp16, dims16)
    jax.block_until_ready((mu16, std16))
    assert mu16.shape == (B, ACTION_DIM) and std16.shape == (B, ACTION_DIM)
    assert jnp.allclose(mu16, mu_ref, atol=2e-2, rtol=2e-2)
    assert jnp.allclose(std16, std_ref, atol=1e-6)

    # TODO(synk): the TruncatedNormal distribution wrapper (sampling/clamping)
    # is host-side utility code, not kernel compute; only (mu, std) are produced.
    print("KERNEL_OK")
</pallas_src>

<mosaic_0001>
module attributes {stable_mosaic.version = 11 : i64} {
  func.func @_actor_kernel(%arg0: i32, %arg1: memref<8x128xf32, #tpu.memory_space<vmem>>, %arg2: memref<128x128xf32, #tpu.memory_space<vmem>>, %arg3: memref<1x128xf32, #tpu.memory_space<vmem>>, %arg4: memref<1x128xf32, #tpu.memory_space<vmem>>, %arg5: memref<1x128xf32, #tpu.memory_space<vmem>>, %arg6: memref<128x128xf32, #tpu.memory_space<vmem>>, %arg7: memref<1x128xf32, #tpu.memory_space<vmem>>, %arg8: memref<128x128xf32, #tpu.memory_space<vmem>>, %arg9: memref<1x128xf32, #tpu.memory_space<vmem>>, %arg10: memref<128x128xf32, #tpu.memory_space<vmem>>, %arg11: memref<1x128xf32, #tpu.memory_space<vmem>>, %arg12: memref<8x128xf32, #tpu.memory_space<vmem>>) attributes {dimension_semantics = [#tpu.dimension_semantics<parallel>], iteration_bounds = array<i64: 1>, scalar_prefetch = 0 : i64, scratch_operands = 0 : i64, tpu.core_type = #tpu.core_type<tc>, window_params = [{transform_indices = @transform_0, window_bounds = array<i64: 8, 128>}, {pipeline_mode = #tpu.pipeline_mode<synchronous>, transform_indices = @transform_1, window_bounds = array<i64: 128, 128>}, {pipeline_mode = #tpu.pipeline_mode<synchronous>, transform_indices = @transform_2, window_bounds = array<i64: 1, 128>}, {pipeline_mode = #tpu.pipeline_mode<synchronous>, transform_indices = @transform_3, window_bounds = array<i64: 1, 128>}, {pipeline_mode = #tpu.pipeline_mode<synchronous>, transform_indices = @transform_4, window_bounds = array<i64: 1, 128>}, {pipeline_mode = #tpu.pipeline_mode<synchronous>, transform_indices = @transform_5, window_bounds = array<i64: 128, 128>}, {pipeline_mode = #tpu.pipeline_mode<synchronous>, transform_indices = @transform_6, window_bounds = array<i64: 1, 128>}, {pipeline_mode = #tpu.pipeline_mode<synchronous>, transform_indices = @transform_7, window_bounds = array<i64: 128, 128>}, {pipeline_mode = #tpu.pipeline_mode<synchronous>, transform_indices = @transform_8, window_bounds = array<i64: 1, 128>}, {pipeline_mode = #tpu.pipeline_mode<synchronous>, transform_indices = @transform_9, window_bounds = array<i64: 128, 128>}, {pipeline_mode = #tpu.pipeline_mode<synchronous>, transform_indices = @transform_10, window_bounds = array<i64: 1, 128>}, {transform_indices = @transform_11, window_bounds = array<i64: 8, 128>}]} {
    %c0 = arith.constant 0 : index
    %c0_0 = arith.constant 0 : index
    %0 = vector.load %arg1[%c0, %c0_0] : memref<8x128xf32, #tpu.memory_space<vmem>>, vector<8x128xf32>
    %c0_1 = arith.constant 0 : index
    %c0_2 = arith.constant 0 : index
    %1 = vector.load %arg2[%c0_1, %c0_2] : memref<128x128xf32, #tpu.memory_space<vmem>>, vector<128x128xf32>
    %cst = arith.constant dense<0.000000e+00> : vector<8x128xf32>
    %2 = tpu.matmul %0, %1, %cst {dimension_numbers = #tpu.dot_dimension_numbers<[1], [0], [0], [1], [0, 0, 1, 1], [], []>} : vector<8x128xf32>, vector<128x128xf32>, vector<8x128xf32> -> vector<8x128xf32>
    %c0_3 = arith.constant 0 : index
    %c0_4 = arith.constant 0 : index
    %3 = vector.load %arg3[%c0_3, %c0_4] : memref<1x128xf32, #tpu.memory_space<vmem>>, vector<1x128xf32>
    %4 = vector.broadcast %3 : vector<1x128xf32> to vector<8x128xf32>
    %5 = arith.addf %2, %4 : vector<8x128xf32>
    %cst_5 = arith.constant dense<0.000000e+00> : vector<8xf32>
    %6 = vector.multi_reduction <add>, %5, %cst_5 [1] : vector<8x128xf32> to vector<8xf32>
    %7 = vector.shape_cast %6 : vector<8xf32> to vector<8x1xf32>
    %cst_6 = arith.constant 3.125000e-02 : f32
    %8 = vector.broadcast %cst_6 : f32 to vector<8x1xf32>
    %9 = arith.mulf %7, %8 : vector<8x1xf32>
    %10 = tpu.iota {dimensions = array<i32: 1>} : vector<8x128xi32>
    %c32_i32 = arith.constant 32 : i32
    %11 = vector.broadcast %c32_i32 : i32 to vector<8x128xi32>
    %12 = arith.cmpi slt, %10, %11 : vector<8x128xi32>
    %13 = vector.broadcast %9 : vector<8x1xf32> to vector<8x128xf32>
    %14 = arith.subf %5, %13 : vector<8x128xf32>
    %cst_7 = arith.constant 0.000000e+00 : f32
    %15 = vector.broadcast %cst_7 : f32 to vector<8x128xf32>
    %16 = arith.select %12, %14, %15 : vector<8x128xi1>, vector<8x128xf32>
    %17 = arith.mulf %16, %16 : vector<8x128xf32>
    %cst_8 = arith.constant dense<0.000000e+00> : vector<8xf32>
    %18 = vector.multi_reduction <add>, %17, %cst_8 [1] : vector<8x128xf32> to vector<8xf32>
    %19 = vector.shape_cast %18 : vector<8xf32> to vector<8x1xf32>
    %cst_9 = arith.constant 3.125000e-02 : f32
    %20 = vector.broadcast %cst_9 : f32 to vector<8x1xf32>
    %21 = arith.mulf %19, %20 : vector<8x1xf32>
    %22 = vector.broadcast %9 : vector<8x1xf32> to vector<8x128xf32>
    %23 = arith.subf %5, %22 : vector<8x128xf32>
    %cst_10 = arith.constant 9.99999974E-6 : f32
    %24 = vector.broadcast %cst_10 : f32 to vector<8x1xf32>
    %25 = arith.addf %21, %24 : vector<8x1xf32>
    %26 = math.rsqrt %25 : vector<8x1xf32>
    %27 = vector.broadcast %26 : vector<8x1xf32> to vector<8x128xf32>
    %28 = arith.mulf %23, %27 : vector<8x128xf32>
    %c0_11 = arith.constant 0 : index
    %c0_12 = arith.constant 0 : index
    %29 = vector.load %arg4[%c0_11, %c0_12] : memref<1x128xf32, #tpu.memory_space<vmem>>, vector<1x128xf32>
    %30 = vector.broadcast %29 : vector<1x128xf32> to vector<8x128xf32>
    %31 = arith.mulf %28, %30 : vector<8x128xf32>
    %c0_13 = arith.constant 0 : index
    %c0_14 = arith.constant 0 : index
    %32 = vector.load %arg5[%c0_13, %c0_14] : memref<1x128xf32, #tpu.memory_space<vmem>>, vector<1x128xf32>
    %33 = vector.broadcast %32 : vector<1x128xf32> to vector<8x128xf32>
    %34 = arith.addf %31, %33 : vector<8x128xf32>
    %35 = math.tanh %34 : vector<8x128xf32>
    %c0_15 = arith.constant 0 : index
    %c0_16 = arith.constant 0 : index
    %36 = vector.load %arg6[%c0_15, %c0_16] : memref<128x128xf32, #tpu.memory_space<vmem>>, vector<128x128xf32>
    %cst_17 = arith.constant dense<0.000000e+00> : vector<8x128xf32>
    %37 = tpu.matmul %35, %36, %cst_17 {dimension_numbers = #tpu.dot_dimension_numbers<[1], [0], [0], [1], [0, 0, 1, 1], [], []>} : vector<8x128xf32>, vector<128x128xf32>, vector<8x128xf32> -> vector<8x128xf32>
    %c0_18 = arith.constant 0 : index
    %c0_19 = arith.constant 0 : index
    %38 = vector.load %arg7[%c0_18, %c0_19] : memref<1x128xf32, #tpu.memory_space<vmem>>, vector<1x128xf32>
    %39 = vector.broadcast %38 : vector<1x128xf32> to vector<8x128xf32>
    %40 = arith.addf %37, %39 : vector<8x128xf32>
    %cst_20 = arith.constant 0.000000e+00 : f32
    %41 = vector.broadcast %cst_20 : f32 to vector<8x128xf32>
    %42 = arith.maximumf %40, %41 : vector<8x128xf32>
    %c0_21 = arith.constant 0 : index
    %c0_22 = arith.constant 0 : index
    %43 = vector.load %arg8[%c0_21, %c0_22] : memref<128x128xf32, #tpu.memory_space<vmem>>, vector<128x128xf32>
    %cst_23 = arith.constant dense<0.000000e+00> : vector<8x128xf32>
    %44 = tpu.matmul %42, %43, %cst_23 {dimension_numbers = #tpu.dot_dimension_numbers<[1], [0], [0], [1], [0, 0, 1, 1], [], []>} : vector<8x128xf32>, vector<128x128xf32>, vector<8x128xf32> -> vector<8x128xf32>
    %c0_24 = arith.constant 0 : index
    %c0_25 = arith.constant 0 : index
    %45 = vector.load %arg9[%c0_24, %c0_25] : memref<1x128xf32, #tpu.memory_space<vmem>>, vector<1x128xf32>
    %46 = vector.broadcast %45 : vector<1x128xf32> to vector<8x128xf32>
    %47 = arith.addf %44, %46 : vector<8x128xf32>
    %cst_26 = arith.constant 0.000000e+00 : f32
    %48 = vector.broadcast %cst_26 : f32 to vector<8x128xf32>
    %49 = arith.maximumf %47, %48 : vector<8x128xf32>
    %c0_27 = arith.constant 0 : index
    %c0_28 = arith.constant 0 : index
    %50 = vector.load %arg10[%c0_27, %c0_28] : memref<128x128xf32, #tpu.memory_space<vmem>>, vector<128x128xf32>
    %cst_29 = arith.constant dense<0.000000e+00> : vector<8x128xf32>
    %51 = tpu.matmul %49, %50, %cst_29 {dimension_numbers = #tpu.dot_dimension_numbers<[1], [0], [0], [1], [0, 0, 1, 1], [], []>} : vector<8x128xf32>, vector<128x128xf32>, vector<8x128xf32> -> vector<8x128xf32>
    %c0_30 = arith.constant 0 : index
    %c0_31 = arith.constant 0 : index
    %52 = vector.load %arg11[%c0_30, %c0_31] : memref<1x128xf32, #tpu.memory_space<vmem>>, vector<1x128xf32>
    %53 = vector.broadcast %52 : vector<1x128xf32> to vector<8x128xf32>
    %54 = arith.addf %51, %53 : vector<8x128xf32>
    %55 = math.tanh %54 : vector<8x128xf32>
    %c0_32 = arith.constant 0 : index
    %c0_33 = arith.constant 0 : index
    %56 = vector.load %arg12[%c0_32, %c0_33] : memref<8x128xf32, #tpu.memory_space<vmem>>, vector<8x128xf32>
    tpu.vector_store %arg12[%c0_32, %c0_33], %55 {strides = array<i32>} : memref<8x128xf32, #tpu.memory_space<vmem>>, vector<8x128xf32>,
    return
  }
  func.func @transform_0(%arg0: i32) -> (i32, i32) {
    %c0_i32 = arith.constant 0 : i32
    %c0_i32_0 = arith.constant 0 : i32
    return %arg0, %c0_i32 : i32, i32
  }
  func.func @transform_1(%arg0: i32) -> (i32, i32) {
    %c0_i32 = arith.constant 0 : i32
    %c0_i32_0 = arith.constant 0 : i32
    %c0_i32_1 = arith.constant 0 : i32
    return %c0_i32, %c0_i32_0 : i32, i32
  }
  func.func @transform_2(%arg0: i32) -> (i32, i32) {
    %c0_i32 = arith.constant 0 : i32
    %c0_i32_0 = arith.constant 0 : i32
    %c0_i32_1 = arith.constant 0 : i32
    return %c0_i32, %c0_i32_0 : i32, i32
  }
  func.func @transform_3(%arg0: i32) -> (i32, i32) {
    %c0_i32 = arith.constant 0 : i32
    %c0_i32_0 = arith.constant 0 : i32
    %c0_i32_1 = arith.constant 0 : i32
    return %c0_i32, %c0_i32_0 : i32, i32
  }
  func.func @transform_4(%arg0: i32) -> (i32, i32) {
    %c0_i32 = arith.constant 0 : i32
    %c0_i32_0 = arith.constant 0 : i32
    %c0_i32_1 = arith.constant 0 : i32
    return %c0_i32, %c0_i32_0 : i32, i32
  }
  func.func @transform_5(%arg0: i32) -> (i32, i32) {
    %c0_i32 = arith.constant 0 : i32
    %c0_i32_0 = arith.constant 0 : i32
    %c0_i32_1 = arith.constant 0 : i32
    return %c0_i32, %c0_i32_0 : i32, i32
  }
  func.func @transform_6(%arg0: i32) -> (i32, i32) {
    %c0_i32 = arith.constant 0 : i32
    %c0_i32_0 = arith.constant 0 : i32
    %c0_i32_1 = arith.constant 0 : i32
    return %c0_i32, %c0_i32_0 : i32, i32
  }
  func.func @transform_7(%arg0: i32) -> (i32, i32) {
    %c0_i32 = arith.constant 0 : i32
    %c0_i32_0 = arith.constant 0 : i32
    %c0_i32_1 = arith.constant 0 : i32
    return %c0_i32, %c0_i32_0 : i32, i32
  }
  func.func @transform_8(%arg0: i32) -> (i32, i32) {
    %c0_i32 = arith.constant 0 : i32
    %c0_i32_0 = arith.constant 0 : i32
    %c0_i32_1 = arith.constant 0 : i32
    return %c0_i32, %c0_i32_0 : i32, i32
  }
  func.func @transform_9(%arg0: i32) -> (i32, i32) {
    %c0_i32 = arith.constant 0 : i32
    %c0_i32_0 = arith.constant 0 : i32
    %c0_i32_1 = arith.constant 0 : i32
    return %c0_i32, %c0_i32_0 : i32, i32
  }
  func.func @transform_10(%arg0: i32) -> (i32, i32) {
    %c0_i32 = arith.constant 0 : i32
    %c0_i32_0 = arith.constant 0 : i32
    %c0_i32_1 = arith.constant 0 : i32
    return %c0_i32, %c0_i32_0 : i32, i32
  }
  func.func @transform_11(%arg0: i32) -> (i32, i32) {
    %c0_i32 = arith.constant 0 : i32
    %c0_i32_0 = arith.constant 0 : i32
    return %arg0, %c0_i32 : i32, i32
  }
}

</mosaic_0001>

<llo_original>
// kernel: tpu_custom_call.1
$region0: #{tpu_custom_call.1}
  #allocation0 [shape = 'u32[]', space=smem, size = 0x4, offset = 0x4, fixed_abs, tag = 'smem constant byte address 0x4 - core index']
  #allocation1 [shape = 'u32[144,128]{1,0:T(1,128)}', space=vmem, size = 0x12000, scoped, tag = 'internal scratch']
  %s0 = inlined_call_operand.hbm [shape: f32[8,128], index: 0, kind: input, shape index: {}]
  %s1 = inlined_call_operand.hbm [shape: f32[128,128], index: 1, kind: input, shape index: {}]
  %s2 = inlined_call_operand.vmem [shape: f32[1,128], index: 2, kind: input, shape index: {}]
  %s3 = inlined_call_operand.vmem [shape: f32[1,128], index: 3, kind: input, shape index: {}]
  %s4 = inlined_call_operand.vmem [shape: f32[1,128], index: 4, kind: input, shape index: {}]
  %s5 = inlined_call_operand.hbm [shape: f32[128,128], index: 5, kind: input, shape index: {}]
  %s6 = inlined_call_operand.vmem [shape: f32[1,128], index: 6, kind: input, shape index: {}]
  %s7 = inlined_call_operand.hbm [shape: f32[128,128], index: 7, kind: input, shape index: {}]
  %s8 = inlined_call_operand.vmem [shape: f32[1,128], index: 8, kind: input, shape index: {}]
  %s9 = inlined_call_operand.hbm [shape: f32[128,128], index: 9, kind: input, shape index: {}]
  %s10 = inlined_call_operand.vmem [shape: f32[1,128], index: 10, kind: input, shape index: {}]
  %s11 = inlined_call_operand.hbm [shape: f32[8,128], index: 11, kind: output, shape index: {}]
  %s12 = sld [smem:[#allocation0]]
  $region74: #{tpu_custom_call.1} parent=0
    _
  %s14 = ssub.s32 1, %s12
  %s15 = scalar_select 0, %s14, %s12
  $region1: #{tpu_custom_call.1} parent=0
    #allocation2 [shape = 'u8[4096]{0}', space=vmem, size = 0x1000, scoped, tag = 'input window, operand 0, single buffered']
    #allocation3 [shape = 's32[1]{0}', space=sflag, size = 0x4, scoped, tag = 'scoped memory for tpu_custom_call.1']
    #allocation4 [shape = 's32[1]{0}', space=sflag, size = 0x4, scoped, tag = 'scoped memory for tpu_custom_call.1']
    #allocation5 [shape = 'u8[65536]{0}', space=vmem, size = 0x10000, scoped, tag = 'input window, operand 1, single buffered']
    #allocation6 [shape = 's32[1]{0}', space=sflag, size = 0x4, scoped, tag = 'scoped memory for tpu_custom_call.1']
    #allocation7 [shape = 'u8[65536]{0}', space=vmem, size = 0x10000, scoped, tag = 'input window, operand 5, single buffered']
    #allocation8 [shape = 'u8[65536]{0}', space=vmem, size = 0x10000, scoped, tag = 'input window, operand 7, single buffered']
    #allocation9 [shape = 's32[1]{0}', space=sflag, size = 0x4, scoped, tag = 'scoped memory for tpu_custom_call.1']
    #allocation10 [shape = 'u8[65536]{0}', space=vmem, size = 0x10000, scoped, tag = 'input window, operand 9, single buffered']
    #allocation11 [shape = 'u8[4096]{0}', space=vmem, size = 0x1000, scoped, tag = 'output window, operand 0, single buffered']
    %16 = vsyncpa [#allocation3], 0
    %17 = vsyncpa [#allocation6], 0
    %18 = vsyncpa [#allocation9], 0
    %19 = vsyncpa [#allocation4], 0
    // Predicated region
    $region2: #{tpu_custom_call.1} parent=1 // pred_check
      _
    $region3: #{tpu_custom_call.1} parent=1 // pred_check_branch
      %21 = sbr.rel (0) target = $region5
    $region4: #{tpu_custom_call.1} parent=1 // pred_region
      %s23 = ssub.s32 128, 128
      %24 = vsyncadd [#allocation3], %s23
      %s26 = sshll.u32 [#allocation2], 4
      %s27 = int_to_ptr.vmem [resolvable:$true] %s26
      %29 = dma.hbm_to_vmem [thread:$0]  %s0, 128, %s27, [#allocation3]
    $region5: #{tpu_custom_call.1} parent=1 // pred_fallthru
      _
    // Predicated region
    $region6: #{tpu_custom_call.1} parent=1 // pred_check
      _
    $region7: #{tpu_custom_call.1} parent=1 // pred_check_branch
      %31 = sbr.rel (0) target = $region9
    $region8: #{tpu_custom_call.1} parent=1 // pred_region
      %s33 = ssub.s32 2048, 2048
      %34 = vsyncadd [#allocation6], %s33
      %s35 = sshll.u32 [#allocation5], 4
      %s36 = int_to_ptr.vmem [resolvable:$true] %s35
      %41 = dma.hbm_to_vmem [thread:$0]  %s1, 2048, %s36, [#allocation6], 128, 128, 8
    $region9: #{tpu_custom_call.1} parent=1 // pred_fallthru
      _
    // Predicated region
    $region10: #{tpu_custom_call.1} parent=1 // pred_check
      _
    $region11: #{tpu_custom_call.1} parent=1 // pred_check_branch
      %43 = sbr.rel (0) target = $region13
    $region12: #{tpu_custom_call.1} parent=1 // pred_region
      _
    $region13: #{tpu_custom_call.1} parent=1 // pred_fallthru
      _
    // Predicated region
    $region14: #{tpu_custom_call.1} parent=1 // pred_check
      _
    $region15: #{tpu_custom_call.1} parent=1 // pred_check_branch
      %45 = sbr.rel (0) target = $region17
    $region16: #{tpu_custom_call.1} parent=1 // pred_region
      _
    $region17: #{tpu_custom_call.1} parent=1 // pred_fallthru
      _
    // Predicated region
    $region18: #{tpu_custom_call.1} parent=1 // pred_check
      _
    $region19: #{tpu_custom_call.1} parent=1 // pred_check_branch
      %47 = sbr.rel (0) target = $region21
    $region20: #{tpu_custom_call.1} parent=1 // pred_region
      _
    $region21: #{tpu_custom_call.1} parent=1 // pred_fallthru
      _
    // Predicated region
    $region22: #{tpu_custom_call.1} parent=1 // pred_check
      _
    $region23: #{tpu_custom_call.1} parent=1 // pred_check_branch
      %49 = sbr.rel (0) target = $region25
    $region24: #{tpu_custom_call.1} parent=1 // pred_region
      %s51 = ssub.s32 2048, 2048
      %52 = vsyncadd [#allocation6], %s51
      %s53 = sshll.u32 [#allocation7], 4
      %s54 = int_to_ptr.vmem [resolvable:$true] %s53
      %59 = dma.hbm_to_vmem [thread:$0]  %s5, 2048, %s54, [#allocation6], 128, 128, 8
    $region25: #{tpu_custom_call.1} parent=1 // pred_fallthru
      _
    // Predicated region
    $region26: #{tpu_custom_call.1} parent=1 // pred_check
      _
    $region27: #{tpu_custom_call.1} parent=1 // pred_check_branch
      %61 = sbr.rel (0) target = $region29
    $region28: #{tpu_custom_call.1} parent=1 // pred_region
      _
    $region29: #{tpu_custom_call.1} parent=1 // pred_fallthru
      _
    // Predicated region
    $region30: #{tpu_custom_call.1} parent=1 // pred_check
      _
    $region31: #{tpu_custom_call.1} parent=1 // pred_check_branch
      %63 = sbr.rel (0) target = $region33
    $region32: #{tpu_custom_call.1} parent=1 // pred_region
      %s65 = ssub.s32 2048, 2048
      %66 = vsyncadd [#allocation9], %s65
      %s67 = sshll.u32 [#allocation8], 4
      %s68 = int_to_ptr.vmem [resolvable:$true] %s67
      %73 = dma.hbm_to_vmem [thread:$0]  %s7, 2048, %s68, [#allocation9], 128, 128, 8
    $region33: #{tpu_custom_call.1} parent=1 // pred_fallthru
      _
    // Predicated region
    $region34: #{tpu_custom_call.1} parent=1 // pred_check
      _
    $region35: #{tpu_custom_call.1} parent=1 // pred_check_branch
      %75 = sbr.rel (0) target = $region37
    $region36: #{tpu_custom_call.1} parent=1 // pred_region
      _
    $region37: #{tpu_custom_call.1} parent=1 // pred_fallthru
      _
    // Predicated region
    $region38: #{tpu_custom_call.1} parent=1 // pred_check
      _
    $region39: #{tpu_custom_call.1} parent=1 // pred_check_branch
      %77 = sbr.rel (0) target = $region41
    $region40: #{tpu_custom_call.1} parent=1 // pred_region
      %s79 = ssub.s32 2048, 2048
      %80 = vsyncadd [#allocation9], %s79
      %s81 = sshll.u32 [#allocation10], 4
      %s82 = int_to_ptr.vmem [resolvable:$true] %s81
      %87 = dma.hbm_to_vmem [thread:$0]  %s9, 2048, %s82, [#allocation9], 128, 128, 8
    $region41: #{tpu_custom_call.1} parent=1 // pred_fallthru
      _
    // Predicated region
    $region42: #{tpu_custom_call.1} parent=1 // pred_check
      _
    $region43: #{tpu_custom_call.1} parent=1 // pred_check_branch
      %89 = sbr.rel (0) target = $region45
    $region44: #{tpu_custom_call.1} parent=1 // pred_region
      _
    $region45: #{tpu_custom_call.1} parent=1 // pred_fallthru
      _
    // Predicated region
    $region46: #{tpu_custom_call.1} parent=1 // pred_check
      _
    $region47: #{tpu_custom_call.1} parent=1 // pred_check_branch
      %91 = sbr.rel (0) target = $region49
    $region48: #{tpu_custom_call.1} parent=1 // pred_region
      %92 = dma.done [#allocation3], 128
    $region49: #{tpu_custom_call.1} parent=1 // pred_fallthru
      _
    // Predicated region
    $region50: #{tpu_custom_call.1} parent=1 // pred_check
      _
    $region51: #{tpu_custom_call.1} parent=1 // pred_check_branch
      %94 = sbr.rel (0) target = $region53
    $region52: #{tpu_custom_call.1} parent=1 // pred_region
      %95 = dma.done [#allocation6], 2048
    $region53: #{tpu_custom_call.1} parent=1 // pred_fallthru
      _
    // Predicated region
    $region54: #{tpu_custom_call.1} parent=1 // pred_check
      _
    $region55: #{tpu_custom_call.1} parent=1 // pred_check_branch
      %97 = sbr.rel (0) target = $region57
    $region56: #{tpu_custom_call.1} parent=1 // pred_region
      %98 = dma.done [#allocation6], 2048
    $region57: #{tpu_custom_call.1} parent=1 // pred_fallthru
      _
    // Predicated region
    $region58: #{tpu_custom_call.1} parent=1 // pred_check
      _
    $region59: #{tpu_custom_call.1} parent=1 // pred_check_branch
      %100 = sbr.rel (0) target = $region61
    $region60: #{tpu_custom_call.1} parent=1 // pred_region
      %101 = dma.done [#allocation9], 2048
    $region61: #{tpu_custom_call.1} parent=1 // pred_fallthru
      _
    // Predicated region
    $region62: #{tpu_custom_call.1} parent=1 // pred_check
      _
    $region63: #{tpu_custom_call.1} parent=1 // pred_check_branch
      %103 = sbr.rel (0) target = $region65
    $region64: #{tpu_custom_call.1} parent=1 // pred_region
      %104 = dma.done [#allocation9], 2048
    $region65: #{tpu_custom_call.1} parent=1 // pred_fallthru
      _
    %v105 = vld [vmem:[#allocation2] sm:$0xff]
    %v106 = vld [vmem:[#allocation5] sm:$0xff]
    %v107 = vld [vmem:[#allocation5 + $0x8] sm:$0xff]
    %v108 = vld [vmem:[#allocation5 + $0x10] sm:$0xff]
    %v109 = vld [vmem:[#allocation5 + $0x18] sm:$0xff]
    %v110 = vld [vmem:[#allocation5 + $0x20] sm:$0xff]
    %v111 = vld [vmem:[#allocation5 + $0x28] sm:$0xff]
    %v112 = vld [vmem:[#allocation5 + $0x30] sm:$0xff]
    %v113 = vld [vmem:[#allocation5 + $0x38] sm:$0xff]
    %v114 = vld [vmem:[#allocation5 + $0x40] sm:$0xff]
    %v115 = vld [vmem:[#allocation5 + $0x48] sm:$0xff]
    %v116 = vld [vmem:[#allocation5 + $0x50] sm:$0xff]
    %v117 = vld [vmem:[#allocation5 + $0x58] sm:$0xff]
    %v118 = vld [vmem:[#allocation5 + $0x60] sm:$0xff]
    %v119 = vld [vmem:[#allocation5 + $0x68] sm:$0xff]
    %v120 = vld [vmem:[#allocation5 + $0x70] sm:$0xff]
    %v121 = vld [vmem:[#allocation5 + $0x78] sm:$0xff]
    %v122 = vld [vmem:[%s2] sm:$0x1]
    %v124 = vlaneseq
    %v125 = vshrl.u32 %v124, 7
    %v126 = vsub.s32 0, %v125
    %v127 = vrot.slane %v122, %v126
    %129 = vmatprep.subr.mxu0 0.0
    %130 = vmatpush1.msra.mxu0 %v106
    %131 = vmatprep.subr.mxu0 0.0
    %132 = vmatpush1.msra.mxu0 %v107
    %133 = vmatprep.subr.mxu0 0.0
    %134 = vmatpush1.msra.mxu0 %v108
    %135 = vmatprep.subr.mxu0 0.0
    %136 = vmatpush1.msra.mxu0 %v109
    %137 = vmatprep.subr.mxu0 0.0
    %138 = vmatpush1.msra.mxu0 %v110
    %139 = vmatprep.subr.mxu0 0.0
    %140 = vmatpush1.msra.mxu0 %v111
    %141 = vmatprep.subr.mxu0 0.0
    %142 = vmatpush1.msra.mxu0 %v112
    %143 = vmatprep.subr.mxu0 0.0
    %144 = vmatpush1.msra.mxu0 %v113
    %145 = vmatprep.subr.mxu0 0.0
    %146 = vmatpush1.msra.mxu0 %v114
    %147 = vmatprep.subr.mxu0 0.0
    %148 = vmatpush1.msra.mxu0 %v115
    %149 = vmatprep.subr.mxu0 0.0
    %150 = vmatpush1.msra.mxu0 %v116
    %151 = vmatprep.subr.mxu0 0.0
    %152 = vmatpush1.msra.mxu0 %v117
    %153 = vmatprep.subr.mxu0 0.0
    %154 = vmatpush1.msra.mxu0 %v118
    %155 = vmatprep.subr.mxu0 0.0
    %156 = vmatpush1.msra.mxu0 %v119
    %157 = vmatprep.subr.mxu0 0.0
    %158 = vmatpush1.msra.mxu0 %v120
    %159 = vmatprep.subr.mxu0 0.0
    %160 = vmatpush1.msra.mxu0 %v121
    %161 = vmatprep.subr.mxu0 0.0
    %162 = vmatpush1.msra.mxu0 0.0
    %163 = vmatprep.subr.mxu0 0.0
    %164 = vmatpush1.msra.mxu0 0.0
    %165 = vmatprep.subr.mxu0 0.0
    %166 = vmatpush1.msra.mxu0 0.0
    %167 = vmatprep.subr.mxu0 0.0
    %168 = vmatpush1.msra.mxu0 0.0
    %169 = vmatprep.subr.mxu0 0.0
    %170 = vmatpush1.msra.mxu0 0.0
    %171 = vmatprep.subr.mxu0 0.0
    %172 = vmatpush1.msra.mxu0 0.0
    %173 = vmatprep.subr.mxu0 0.0
    %174 = vmatpush1.msra.mxu0 0.0
    %175 = vmatprep.subr.mxu0 0.0
    %176 = vmatpush1.msra.mxu0 0.0
    %177 = vmatprep.subr.mxu0 0.0
    %178 = vmatpush1.msra.mxu0 0.0
    %179 = vmatprep.subr.mxu0 0.0
    %180 = vmatpush1.msra.mxu0 0.0
    %181 = vmatprep.subr.mxu0 0.0
    %182 = vmatpush1.msra.mxu0 0.0
    %183 = vmatprep.subr.mxu0 0.0
    %184 = vmatpush1.msra.mxu0 0.0
    %185 = vmatprep.subr.mxu0 0.0
    %186 = vmatpush1.msra.mxu0 0.0
    %187 = vmatprep.subr.mxu0 0.0
    %188 = vmatpush1.msra.mxu0 0.0
    %189 = vmatprep.subr.mxu0 0.0
    %190 = vmatpush1.msra.mxu0 0.0
    %191 = vmatprep.subr.mxu0 0.0
    %192 = vmatpush1.msra.mxu0 0.0
    %193 = vmatprep.mubr.f32.mxu0 0.0
    %194 = vmatmul.mubr.f32.gmra.mrb[0].mxu0 %v105
    %v195 = vpop.f32.mrb[0].mxu0
    %v196 = vadd.f32 %v127, %v195
    %v197 = vpop.f32.mrb[0].mxu0
    %198 = vdwg.mxu0
    %199 = vadd.xlane.f32.xlu0 %v196
    %v200 = vpop.xlane.xlu0 %199
    %v201 = vmul.f32 %v200, 0.03125
    %v202 = vlaneseq
    %v203 = vand.u32 %v202, 127
    %vm204 = vcmp.lt.s32.totalorder %v203, 32
    %v205 = vsub.f32 %v196, %v201
    %v206 = vsel %vm204, %v205, 0.0
    %v207 = vmul.f32 %v206, %v206
    %208 = vadd.xlane.f32.xlu0 %v207
    %v209 = vpop.xlane.xlu0 %208
    %v210 = vmul.f32 %v209, 0.03125
    %v211 = vadd.f32 %v210, 1e-05
    %v212 = vrsqrt.pop %v211
    %v213 = vmul.f32 %v205, %v212
    %v214 = vld [vmem:[%s3] sm:$0x1]
    %v216 = vlaneseq
    %v217 = vshrl.u32 %v216, 7
    %v218 = vsub.s32 0, %v217
    %v219 = vrot.slane %v214, %v218
    %v221 = vmul.f32 %v213, %v219
    %v222 = vld [vmem:[%s4] sm:$0x1]
    %v224 = vlaneseq
    %v225 = vshrl.u32 %v224, 7
    %v226 = vsub.s32 0, %v225
    %v227 = vrot.slane %v222, %v226
    %v229 = vadd.f32 %v221, %v227
    %v230 = vtanh.pop %v229
    %v231 = vld [vmem:[#allocation7] sm:$0xff]
    %v232 = vld [vmem:[#allocation7 + $0x8] sm:$0xff]
    %v233 = vld [vmem:[#allocation7 + $0x10] sm:$0xff]
    %v234 = vld [vmem:[#allocation7 + $0x18] sm:$0xff]
    %v235 = vld [vmem:[#allocation7 + $0x20] sm:$0xff]
    %v236 = vld [vmem:[#allocation7 + $0x28] sm:$0xff]
    %v237 = vld [vmem:[#allocation7 + $0x30] sm:$0xff]
    %v238 = vld [vmem:[#allocation7 + $0x38] sm:$0xff]
    %v239 = vld [vmem:[#allocation7 + $0x40] sm:$0xff]
    %v240 = vld [vmem:[#allocation7 + $0x48] sm:$0xff]
    %v241 = vld [vmem:[#allocation7 + $0x50] sm:$0xff]
    %v242 = vld [vmem:[#allocation7 + $0x58] sm:$0xff]
    %v243 = vld [vmem:[#allocation7 + $0x60] sm:$0xff]
    %v244 = vld [vmem:[#allocation7 + $0x68] sm:$0xff]
    %v245 = vld [vmem:[#allocation7 + $0x70] sm:$0xff]
    %v246 = vld [vmem:[#allocation7 + $0x78] sm:$0xff]
    %v247 = vld [vmem:[%s6] sm:$0x1]
    %v249 = vlaneseq
    %v250 = vshrl.u32 %v249, 7
    %v251 = vsub.s32 0, %v250
    %v252 = vrot.slane %v247, %v251
    %254 = vmatprep.subr.mxu0 0.0
    %255 = vmatpush1.msra.mxu0 %v231
    %256 = vmatprep.subr.mxu0 0.0
    %257 = vmatpush1.msra.mxu0 %v232
    %258 = vmatprep.subr.mxu0 0.0
    %259 = vmatpush1.msra.mxu0 %v233
    %260 = vmatprep.subr.mxu0 0.0
    %261 = vmatpush1.msra.mxu0 %v234
    %262 = vmatprep.subr.mxu0 0.0
    %263 = vmatpush1.msra.mxu0 %v235
    %264 = vmatprep.subr.mxu0 0.0
    %265 = vmatpush1.msra.mxu0 %v236
    %266 = vmatprep.subr.mxu0 0.0
    %267 = vmatpush1.msra.mxu0 %v237
    %268 = vmatprep.subr.mxu0 0.0
    %269 = vmatpush1.msra.mxu0 %v238
    %270 = vmatprep.subr.mxu0 0.0
    %271 = vmatpush1.msra.mxu0 %v239
    %272 = vmatprep.subr.mxu0 0.0
    %273 = vmatpush1.msra.mxu0 %v240
    %274 = vmatprep.subr.mxu0 0.0
    %275 = vmatpush1.msra.mxu0 %v241
    %276 = vmatprep.subr.mxu0 0.0
    %277 = vmatpush1.msra.mxu0 %v242
    %278 = vmatprep.subr.mxu0 0.0
    %279 = vmatpush1.msra.mxu0 %v243
    %280 = vmatprep.subr.mxu0 0.0
    %281 = vmatpush1.msra.mxu0 %v244
    %282 = vmatprep.subr.mxu0 0.0
    %283 = vmatpush1.msra.mxu0 %v245
    %284 = vmatprep.subr.mxu0 0.0
    %285 = vmatpush1.msra.mxu0 %v246
    %286 = vmatprep.subr.mxu0 0.0
    %287 = vmatpush1.msra.mxu0 0.0
    %288 = vmatprep.subr.mxu0 0.0
    %289 = vmatpush1.msra.mxu0 0.0
    %290 = vmatprep.subr.mxu0 0.0
    %291 = vmatpush1.msra.mxu0 0.0
    %292 = vmatprep.subr.mxu0 0.0
    %293 = vmatpush1.msra.mxu0 0.0
    %294 = vmatprep.subr.mxu0 0.0
    %295 = vmatpush1.msra.mxu0 0.0
    %296 = vmatprep.subr.mxu0 0.0
    %297 = vmatpush1.msra.mxu0 0.0
    %298 = vmatprep.subr.mxu0 0.0
    %299 = vmatpush1.msra.mxu0 0.0
    %300 = vmatprep.subr.mxu0 0.0
    %301 = vmatpush1.msra.mxu0 0.0
    %302 = vmatprep.subr.mxu0 0.0
    %303 = vmatpush1.msra.mxu0 0.0
    %304 = vmatprep.subr.mxu0 0.0
    %305 = vmatpush1.msra.mxu0 0.0
    %306 = vmatprep.subr.mxu0 0.0
    %307 = vmatpush1.msra.mxu0 0.0
    %308 = vmatprep.subr.mxu0 0.0
    %309 = vmatpush1.msra.mxu0 0.0
    %310 = vmatprep.subr.mxu0 0.0
    %311 = vmatpush1.msra.mxu0 0.0
    %312 = vmatprep.subr.mxu0 0.0
    %313 = vmatpush1.msra.mxu0 0.0
    %314 = vmatprep.subr.mxu0 0.0
    %315 = vmatpush1.msra.mxu0 0.0
    %316 = vmatprep.subr.mxu0 0.0
    %317 = vmatpush1.msra.mxu0 0.0
    %318 = vmatprep.mubr.f32.mxu0 0.0
    %319 = vmatmul.mubr.f32.gmra.mrb[0].mxu0 %v230
    %v320 = vpop.f32.mrb[0].mxu0
    %v321 = vadd.f32 %v252, %v320
    %v322 = vpop.f32.mrb[0].mxu0
    %323 = vdwg.mxu0
    %v324 = vmax.f32 %v321, 0.0
    %v325 = vld [vmem:[#allocation8] sm:$0xff]
    %v326 = vld [vmem:[#allocation8 + $0x8] sm:$0xff]
    %v327 = vld [vmem:[#allocation8 + $0x10] sm:$0xff]
    %v328 = vld [vmem:[#allocation8 + $0x18] sm:$0xff]
    %v329 = vld [vmem:[#allocation8 + $0x20] sm:$0xff]
    %v330 = vld [vmem:[#allocation8 + $0x28] sm:$0xff]
    %v331 = vld [vmem:[#allocation8 + $0x30] sm:$0xff]
    %v332 = vld [vmem:[#allocation8 + $0x38] sm:$0xff]
    %v333 = vld [vmem:[#allocation8 + $0x40] sm:$0xff]
    %v334 = vld [vmem:[#allocation8 + $0x48] sm:$0xff]
    %v335 = vld [vmem:[#allocation8 + $0x50] sm:$0xff]
    %v336 = vld [vmem:[#allocation8 + $0x58] sm:$0xff]
    %v337 = vld [vmem:[#allocation8 + $0x60] sm:$0xff]
    %v338 = vld [vmem:[#allocation8 + $0x68] sm:$0xff]
    %v339 = vld [vmem:[#allocation8 + $0x70] sm:$0xff]
    %v340 = vld [vmem:[#allocation8 + $0x78] sm:$0xff]
    %v341 = vld [vmem:[%s8] sm:$0x1]
    %v343 = vlaneseq
    %v344 = vshrl.u32 %v343, 7
    %v345 = vsub.s32 0, %v344
    %v346 = vrot.slane %v341, %v345
    %348 = vmatprep.subr.mxu0 0.0
    %349 = vmatpush1.msra.mxu0 %v325
    %350 = vmatprep.subr.mxu0 0.0
    %351 = vmatpush1.msra.mxu0 %v326
    %352 = vmatprep.subr.mxu0 0.0
    %353 = vmatpush1.msra.mxu0 %v327
    %354 = vmatprep.subr.mxu0 0.0
    %355 = vmatpush1.msra.mxu0 %v328
    %356 = vmatprep.subr.mxu0 0.0
    %357 = vmatpush1.msra.mxu0 %v329
    %358 = vmatprep.subr.mxu0 0.0
    %359 = vmatpush1.msra.mxu0 %v330
    %360 = vmatprep.subr.mxu0 0.0
    %361 = vmatpush1.msra.mxu0 %v331
    %362 = vmatprep.subr.mxu0 0.0
    %363 = vmatpush1.msra.mxu0 %v332
    %364 = vmatprep.subr.mxu0 0.0
    %365 = vmatpush1.msra.mxu0 %v333
    %366 = vmatprep.subr.mxu0 0.0
    %367 = vmatpush1.msra.mxu0 %v334
    %368 = vmatprep.subr.mxu0 0.0
    %369 = vmatpush1.msra.mxu0 %v335
    %370 = vmatprep.subr.mxu0 0.0
    %371 = vmatpush1.msra.mxu0 %v336
    %372 = vmatprep.subr.mxu0 0.0
    %373 = vmatpush1.msra.mxu0 %v337
    %374 = vmatprep.subr.mxu0 0.0
    %375 = vmatpush1.msra.mxu0 %v338
    %376 = vmatprep.subr.mxu0 0.0
    %377 = vmatpush1.msra.mxu0 %v339
    %378 = vmatprep.subr.mxu0 0.0
    %379 = vmatpush1.msra.mxu0 %v340
    %380 = vmatprep.subr.mxu0 0.0
    %381 = vmatpush1.msra.mxu0 0.0
    %382 = vmatprep.subr.mxu0 0.0
    %383 = vmatpush1.msra.mxu0 0.0
    %384 = vmatprep.subr.mxu0 0.0
    %385 = vmatpush1.msra.mxu0 0.0
    %386 = vmatprep.subr.mxu0 0.0
    %387 = vmatpush1.msra.mxu0 0.0
    %388 = vmatprep.subr.mxu0 0.0
    %389 = vmatpush1.msra.mxu0 0.0
    %390 = vmatprep.subr.mxu0 0.0
    %391 = vmatpush1.msra.mxu0 0.0
    %392 = vmatprep.subr.mxu0 0.0
    %393 = vmatpush1.msra.mxu0 0.0
    %394 = vmatprep.subr.mxu0 0.0
    %395 = vmatpush1.msra.mxu0 0.0
    %396 = vmatprep.subr.mxu0 0.0
    %397 = vmatpush1.msra.mxu0 0.0
    %398 = vmatprep.subr.mxu0 0.0
    %399 = vmatpush1.msra.mxu0 0.0
    %400 = vmatprep.subr.mxu0 0.0
    %401 = vmatpush1.msra.mxu0 0.0
    %402 = vmatprep.subr.mxu0 0.0
    %403 = vmatpush1.msra.mxu0 0.0
    %404 = vmatprep.subr.mxu0 0.0
    %405 = vmatpush1.msra.mxu0 0.0
    %406 = vmatprep.subr.mxu0 0.0
    %407 = vmatpush1.msra.mxu0 0.0
    %408 = vmatprep.subr.mxu0 0.0
    %409 = vmatpush1.msra.mxu0 0.0
    %410 = vmatprep.subr.mxu0 0.0
    %411 = vmatpush1.msra.mxu0 0.0
    %412 = vmatprep.mubr.f32.mxu0 0.0
    %413 = vmatmul.mubr.f32.gmra.mrb[0].mxu0 %v324
    %v414 = vpop.f32.mrb[0].mxu0
    %v415 = vadd.f32 %v346, %v414
    %v416 = vpop.f32.mrb[0].mxu0
    %417 = vdwg.mxu0
    %v418 = vmax.f32 %v415, 0.0
    %v419 = vld [vmem:[#allocation10] sm:$0xff]
    %v420 = vld [vmem:[#allocation10 + $0x8] sm:$0xff]
    %v421 = vld [vmem:[#allocation10 + $0x10] sm:$0xff]
    %v422 = vld [vmem:[#allocation10 + $0x18] sm:$0xff]
    %v423 = vld [vmem:[#allocation10 + $0x20] sm:$0xff]
    %v424 = vld [vmem:[#allocation10 + $0x28] sm:$0xff]
    %v425 = vld [vmem:[#allocation10 + $0x30] sm:$0xff]
    %v426 = vld [vmem:[#allocation10 + $0x38] sm:$0xff]
    %v427 = vld [vmem:[#allocation10 + $0x40] sm:$0xff]
    %v428 = vld [vmem:[#allocation10 + $0x48] sm:$0xff]
    %v429 = vld [vmem:[#allocation10 + $0x50] sm:$0xff]
    %v430 = vld [vmem:[#allocation10 + $0x58] sm:$0xff]
    %v431 = vld [vmem:[#allocation10 + $0x60] sm:$0xff]
    %v432 = vld [vmem:[#allocation10 + $0x68] sm:$0xff]
    %v433 = vld [vmem:[#allocation10 + $0x70] sm:$0xff]
    %v434 = vld [vmem:[#allocation10 + $0x78] sm:$0xff]
    %v435 = vld [vmem:[%s10] sm:$0x1]
    %v437 = vlaneseq
    %v438 = vshrl.u32 %v437, 7
    %v439 = vsub.s32 0, %v438
    %v440 = vrot.slane %v435, %v439
    %442 = vmatprep.subr.mxu0 0.0
    %443 = vmatpush1.msra.mxu0 %v419
    %444 = vmatprep.subr.mxu0 0.0
    %445 = vmatpush1.msra.mxu0 %v420
    %446 = vmatprep.subr.mxu0 0.0
    %447 = vmatpush1.msra.mxu0 %v421
    %448 = vmatprep.subr.mxu0 0.0
    %449 = vmatpush1.msra.mxu0 %v422
    %450 = vmatprep.subr.mxu0 0.0
    %451 = vmatpush1.msra.mxu0 %v423
    %452 = vmatprep.subr.mxu0 0.0
    %453 = vmatpush1.msra.mxu0 %v424
    %454 = vmatprep.subr.mxu0 0.0
    %455 = vmatpush1.msra.mxu0 %v425
    %456 = vmatprep.subr.mxu0 0.0
    %457 = vmatpush1.msra.mxu0 %v426
    %458 = vmatprep.subr.mxu0 0.0
    %459 = vmatpush1.msra.mxu0 %v427
    %460 = vmatprep.subr.mxu0 0.0
    %461 = vmatpush1.msra.mxu0 %v428
    %462 = vmatprep.subr.mxu0 0.0
    %463 = vmatpush1.msra.mxu0 %v429
    %464 = vmatprep.subr.mxu0 0.0
    %465 = vmatpush1.msra.mxu0 %v430
    %466 = vmatprep.subr.mxu0 0.0
    %467 = vmatpush1.msra.mxu0 %v431
    %468 = vmatprep.subr.mxu0 0.0
    %469 = vmatpush1.msra.mxu0 %v432
    %470 = vmatprep.subr.mxu0 0.0
    %471 = vmatpush1.msra.mxu0 %v433
    %472 = vmatprep.subr.mxu0 0.0
    %473 = vmatpush1.msra.mxu0 %v434
    %474 = vmatprep.subr.mxu0 0.0
    %475 = vmatpush1.msra.mxu0 0.0
    %476 = vmatprep.subr.mxu0 0.0
    %477 = vmatpush1.msra.mxu0 0.0
    %478 = vmatprep.subr.mxu0 0.0
    %479 = vmatpush1.msra.mxu0 0.0
    %480 = vmatprep.subr.mxu0 0.0
    %481 = vmatpush1.msra.mxu0 0.0
    %482 = vmatprep.subr.mxu0 0.0
    %483 = vmatpush1.msra.mxu0 0.0
    %484 = vmatprep.subr.mxu0 0.0
    %485 = vmatpush1.msra.mxu0 0.0
    %486 = vmatprep.subr.mxu0 0.0
    %487 = vmatpush1.msra.mxu0 0.0
    %488 = vmatprep.subr.mxu0 0.0
    %489 = vmatpush1.msra.mxu0 0.0
    %490 = vmatprep.subr.mxu0 0.0
    %491 = vmatpush1.msra.mxu0 0.0
    %492 = vmatprep.subr.mxu0 0.0
    %493 = vmatpush1.msra.mxu0 0.0
    %494 = vmatprep.subr.mxu0 0.0
    %495 = vmatpush1.msra.mxu0 0.0
    %496 = vmatprep.subr.mxu0 0.0
    %497 = vmatpush1.msra.mxu0 0.0
    %498 = vmatprep.subr.mxu0 0.0
    %499 = vmatpush1.msra.mxu0 0.0
    %500 = vmatprep.subr.mxu0 0.0
    %501 = vmatpush1.msra.mxu0 0.0
    %502 = vmatprep.subr.mxu0 0.0
    %503 = vmatpush1.msra.mxu0 0.0
    %504 = vmatprep.subr.mxu0 0.0
    %505 = vmatpush1.msra.mxu0 0.0
    %506 = vmatprep.mubr.f32.mxu0 0.0
    %507 = vmatmul.mubr.f32.gmra.mrb[0].mxu0 %v418
    %v508 = vpop.f32.mrb[0].mxu0
    %v509 = vadd.f32 %v440, %v508
    %v510 = vpop.f32.mrb[0].mxu0
    %511 = vdwg.mxu0
    %v512 = vtanh.pop %v509
    %513 = vst [vmem:[#allocation11] sm:$0xff] %v512
    // Predicated region
    $region66: #{tpu_custom_call.1} parent=1 // pred_check
      _
    $region67: #{tpu_custom_call.1} parent=1 // pred_check_branch
      %515 = sbr.rel (0) target = $region69
    $region68: #{tpu_custom_call.1} parent=1 // pred_region
      %s517 = ssub.s32 128, 128
      %518 = vsyncadd [#allocation4], %s517
      %s520 = sshll.u32 [#allocation11], 4
      %s521 = int_to_ptr.vmem [resolvable:$true] %s520
      %523 = dma.vmem_to_hbm [thread:$0]  %s521, 128, %s11, [#allocation4]
    $region69: #{tpu_custom_call.1} parent=1 // pred_fallthru
      _
    // Predicated region
    $region70: #{tpu_custom_call.1} parent=1 // pred_check
      _
    $region71: #{tpu_custom_call.1} parent=1 // pred_check_branch
      %525 = sbr.rel (0) target = $region73
    $region72: #{tpu_custom_call.1} parent=1 // pred_region
      %526 = dma.done [#allocation4], 128
    $region73: #{tpu_custom_call.1} parent=1 // pred_fallthru
      _
    %527 = vsyncpa [#allocation3], 1
    %528 = vsyncpa [#allocation6], 1
    %529 = vsyncpa [#allocation9], 1
    %530 = vsyncpa [#allocation4], 1

</llo_original>
